<compile_context>
chip_gen: v5e
topology: v5e:2x2
jax: 0.10.0
libtpu: 0.0.40
codegen_flags: <defaults>
</compile_context>

<pallas_src>
import functools

import numpy as np
import jax
import jax.numpy as jnp
from jax.experimental import pallas as pl
from jax.experimental.pallas import tpu as pltpu

K, STRIDE, PAD = 3, 2, 1   # the fused kernel is specialized to the module's config


# ------------------------------ Pallas kernel -------------------------------- #
def _unet_fused_kernel(xflat_ref, pt1_ref, w1_ref, p1_ref, w2_ref, p2_ref, g_ref,
                       o_ref, ysc_ref, *, wi):
    """One batch element per grid step; everything stays resident in VMEM.

    xflat_ref : (Cin, H*W)        input, flattened spatially (for the channel concat)
    pt1_ref   : (K*K*Cin, Hi*Wi)  conv1 im2col patches, taps on sublanes / pixels on lanes
    w1_ref    : (C1, K*K*Cin)     conv1 weight with BN scale folded in
    p1_ref    : (C1, 2)           col0 = conv-bias + BN shift, col1 = PReLU alpha
    w2_ref    : (4*Cout, 4*C1)    convT sub-pixel (parity-class) weights, BN scale folded
    p2_ref    : (Cout, 2)         col0 = shift, col1 = alpha
    g_ref     : (4, Hi*Wi, H*W)   constant 0/1 scatter (parity de-interleave + replicate pad)
    o_ref     : (Cin+Cout, H*W)   output = [x ; convT result], lane-dense (H*W = 256)
    ysc_ref   : (C1, >=Hi*Wi+wi+1) scratch holding zero-extended conv1 activation
    """
    cin = xflat_ref.shape[0]
    c1 = w1_ref.shape[0]
    cout = p2_ref.shape[0]
    hiwi = pt1_ref.shape[1]

    # ---- Conv2d(stride 2) + BatchNorm2d(eval) + PReLU  ->  y1 [C1, Hi*Wi] ----
    y1 = jnp.dot(w1_ref[...], pt1_ref[...], preferred_element_type=jnp.float32)
    y1 = y1 + p1_ref[:, 0:1]
    y1 = jnp.where(y1 >= 0.0, y1, p1_ref[:, 1:2] * y1)

    # ---- shifted copies of y1 for the 4 transposed-conv parity classes ----
    # y01 = y[., m, n+1], y10 = y[., m+1, n], y11 = y[., m+1, n+1]  (zero beyond edges)
    ysc_ref[:, 0:hiwi] = y1
    # zero the tail every step: scratch is per-core and not guaranteed initialized,
    # and with "parallel" batch sharding program_id==0 may never run on a given core.
    ysc_ref[:, hiwi:] = jnp.zeros((c1, ysc_ref.shape[1] - hiwi), jnp.float32)
    lane = jax.lax.broadcasted_iota(jnp.int32, (c1, hiwi), 1)
    n_is_last = jnp.bitwise_and(lane, wi - 1) == (wi - 1)      # column n == Wi-1 (wi pow2)
    y01 = jnp.where(n_is_last, 0.0, ysc_ref[:, 1:1 + hiwi])
    y10 = ysc_ref[:, wi:wi + hiwi]                             # m==Hi-1 rows read zeros
    y11 = jnp.where(n_is_last, 0.0, ysc_ref[:, wi + 1:wi + 1 + hiwi])
    p_all = jnp.concatenate([y1, y01, y10, y11], axis=0)       # [4*C1, Hi*Wi]

    # ---- ConvTranspose2d (BN scale folded in) as one MXU matmul over all classes ----
    cls = jnp.dot(w2_ref[...], p_all, preferred_element_type=jnp.float32)  # [4*Cout, Hi*Wi]

    # ---- parity de-interleave + replicate pad to HxW via constant 0/1 matmuls ----
    out = None
    for c in range(4):                                          # static unroll, 4 MXU pushes
        part = jnp.dot(cls[c * cout:(c + 1) * cout, :], g_ref[c],
                       preferred_element_type=jnp.float32)      # [Cout, H*W]
        out = part if out is None else out + part
    out = out + p2_ref[:, 0:1]
    out = jnp.where(out >= 0.0, out, p2_ref[:, 1:2] * out)      # BN shift + PReLU

    # ---- channel concat [x ; out] straight into the lane-dense NCHW-flat output ----
    o_ref[0:cin, :] = xflat_ref[...]
    o_ref[cin:cin + cout, :] = out


# ------------------------------- JAX wrapper ---------------------------------- #
def unet_block_forward(x, prep):
    """x: [N, Cin, H, W] f32  ->  [N, Cin+Cout, H, W] f32 (eval-mode UNetBlock)."""
    N, Cin, H, W = x.shape
    C1 = prep["w1"].shape[0]
    Cout = prep["p2"].shape[0]
    Hi = (H + 2 * PAD - K) // STRIDE + 1
    Wi = (W + 2 * PAD - K) // STRIDE + 1
    assert Wi & (Wi - 1) == 0, "kernel mask assumes Wi is a power of two"
    Ctot = Cin + Cout

    # conv1 im2col in transposed "(tap,ci) x output-pixel" layout (pixels on lanes).
    xp = jnp.pad(x, ((0, 0), (0, 0), (PAD, PAD), (PAD, PAD)))   # zero pad (Conv2d padding)
    taps = [xp[:, :, dh:dh + STRIDE * Hi:STRIDE, dw:dw + STRIDE * Wi:STRIDE]
            for dh in range(K) for dw in range(K)]
    pt1 = jnp.stack(taps, axis=1).reshape(N, K * K * Cin, Hi * Wi)    # [N, 36, 64]
    xflat = x.reshape(N, Cin, H * W)                                  # [N, 4, 256]

    scr_lanes = ((Hi * Wi + Wi + 1 + 127) // 128) * 128

    out = pl.pallas_call(
        functools.partial(_unet_fused_kernel, wi=Wi),
        out_shape=jax.ShapeDtypeStruct((N, Ctot, H * W), jnp.float32),
        grid_spec=pltpu.PrefetchScalarGridSpec(
            num_scalar_prefetch=0,
            grid=(N,),
            in_specs=[
                pl.BlockSpec((None, Cin, H * W), lambda i: (i, 0, 0)),            # xflat
                pl.BlockSpec((None, K * K * Cin, Hi * Wi), lambda i: (i, 0, 0)),  # pt1
                pl.BlockSpec((C1, K * K * Cin), lambda i: (0, 0)),                # w1
                pl.BlockSpec((C1, 2), lambda i: (0, 0)),                          # p1
                pl.BlockSpec((4 * Cout, 4 * C1), lambda i: (0, 0)),               # w2
                pl.BlockSpec((Cout, 2), lambda i: (0, 0)),                        # p2
                pl.BlockSpec((4, Hi * Wi, H * W), lambda i: (0, 0, 0)),           # g
            ],
            out_specs=pl.BlockSpec((None, Ctot, H * W), lambda i: (i, 0, 0)),
            scratch_shapes=[pltpu.VMEM((C1, scr_lanes), jnp.float32)],
        ),
        compiler_params=pltpu.CompilerParams(
            dimension_semantics=("parallel",),       # batch sharded over v7x's 2 TCs
            vmem_limit_bytes=8 * 1024 * 1024,
        ),
    )(xflat, pt1, prep["w1"], prep["p1"], prep["w2"], prep["p2"], prep["g"])

    return out.reshape(N, Ctot, H, W)   # free trailing-dim split (layout preserving)


# --------------------------- host-side preparation ---------------------------- #
def _build_scatter(H, W, Hi, Wi):
    """Constant 0/1 matrices: (class, q=m*Wi+n) -> final flattened (OH*W+OW) position.

    Encodes (a) the de-interleave of the 4 transposed-conv output parity classes and
    (b) the UNet post-upsample replicate pad, including the original module's F.pad
    ordering quirk (height-diff pads the width axis and vice versa)."""
    Ho_t, Wo_t = STRIDE * (Hi - 1) + K - 2 * PAD, STRIDE * (Wi - 1) + K - 2 * PAD
    hd, wd = H - Ho_t, W - Wo_t
    pw_l = hd // 2            # width pads come from the height diff (module quirk)
    ph_t = wd // 2            # height pads come from the width diff
    G = np.zeros((4, Hi * Wi, H * W), np.float32)
    for OH in range(H):
        oh = min(max(OH - ph_t, 0), Ho_t - 1)         # replicate clamp
        for OW in range(W):
            ow = min(max(OW - pw_l, 0), Wo_t - 1)
            c = (oh % 2) * 2 + (ow % 2)
            q = (oh // 2) * Wi + (ow // 2)
            G[c, q, OH * W + OW] = 1.0
    return G


def prepare_params(params, H, W):
    """Fold conv bias + BatchNorm(eval) into weights/shifts, build sub-pixel convT
    weights and the constant scatter matrices. Done once, outside the hot path."""
    assert (K, STRIDE, PAD) == (3, 2, 1)
    c1p, c2p = params["conv1"], params["convt"]
    C1, Cin = c1p["w"].shape[0], c1p["w"].shape[1]
    Cout = c2p["w"].shape[1]
    Hi = (H + 2 * PAD - K) // STRIDE + 1
    Wi = (W + 2 * PAD - K) // STRIDE + 1

    # Conv2d + BN(eval): fold BN scale into the weight, bias+shift into one column.
    s1 = c1p["gamma"] / jnp.sqrt(c1p["rv"] + 1e-5)
    sh1 = (c1p["b"] - c1p["rm"]) * s1 + c1p["beta"]
    w1 = (jnp.transpose(c1p["w"], (0, 2, 3, 1)).reshape(C1, K * K * Cin)
          * s1[:, None]).astype(jnp.float32)
    p1 = jnp.stack([sh1, c1p["alpha"]], axis=1).astype(jnp.float32)        # [C1, 2]

    # ConvTranspose2d -> 4 sub-pixel output-parity classes of an ordinary conv on y1.
    # class c = (oh%2)*2 + (ow%2); shift s: 0:(m,n) 1:(m,n+1) 2:(m+1,n) 3:(m+1,n+1)
    s2 = c2p["gamma"] / jnp.sqrt(c2p["rv"] + 1e-5)
    sh2 = (c2p["b"] - c2p["rm"]) * s2 + c2p["beta"]
    w_eq = jnp.transpose(jnp.flip(c2p["w"], (2, 3)), (1, 0, 2, 3))         # [Cout,C1,K,K]
    taps = {0: [(0, 1, 1)],
            1: [(0, 1, 0), (1, 1, 2)],
            2: [(0, 0, 1), (2, 2, 1)],
            3: [(0, 0, 0), (1, 0, 2), (2, 2, 0), (3, 2, 2)]}
    w2 = jnp.zeros((4 * Cout, 4 * C1), jnp.float32)
    for c, lst in taps.items():
        for (s, kh, kw) in lst:
            w2 = w2.at[c * Cout:(c + 1) * Cout, s * C1:(s + 1) * C1].set(w_eq[:, :, kh, kw])
    w2 = w2 * jnp.tile(s2, 4)[:, None]                                     # fold BN scale
    p2 = jnp.stack([sh2, c2p["alpha"]], axis=1).astype(jnp.float32)        # [Cout, 2]

    g = jnp.asarray(_build_scatter(H, W, Hi, Wi))
    return dict(w1=w1, p1=p1, w2=w2, p2=p2, g=g)


# ------------------------------ parameters ------------------------------------ #
def init_params(key, input_nc, inner_nc, outer_nc, k):
    ks = jax.random.split(key, 12)

    def u(kk, shape, scale=0.1):
        return jax.random.uniform(kk, shape, jnp.float32, -scale, scale)

    conv1 = dict(
        w=u(ks[0], (inner_nc, input_nc, k, k), 0.2),     # Conv2d weight [Cout,Cin,kh,kw]
        b=u(ks[1], (inner_nc,)),
        gamma=1.0 + u(ks[2], (inner_nc,)),
        beta=u(ks[3], (inner_nc,)),
        rm=u(ks[4], (inner_nc,)),
        rv=1.0 + jnp.abs(u(ks[5], (inner_nc,))),
        alpha=jnp.full((inner_nc,), 0.25, jnp.float32),  # PReLU default init
    )
    convt = dict(
        w=u(ks[6], (inner_nc, outer_nc, k, k), 0.2),     # ConvTranspose2d [Cin,Cout,kh,kw]
        b=u(ks[7], (outer_nc,)),
        gamma=1.0 + u(ks[8], (outer_nc,)),
        beta=u(ks[9], (outer_nc,)),
        rm=u(ks[10], (outer_nc,)),
        rv=1.0 + jnp.abs(u(ks[11], (outer_nc,))),
        alpha=jnp.full((outer_nc,), 0.25, jnp.float32),
    )
    return dict(conv1=conv1, convt=convt)


# ----------------------------- pure-JAX reference ------------------------------ #
def _ref_bn_prelu(y, p):
    inv = 1.0 / jnp.sqrt(p["rv"] + 1e-5)
    y = (y - p["rm"][None, :, None, None]) * (inv * p["gamma"])[None, :, None, None] \
        + p["beta"][None, :, None, None]
    return jnp.where(y >= 0, y, p["alpha"][None, :, None, None] * y)


def reference_forward(x, params, k, stride, pad):
    p = params["conv1"]
    y = jax.lax.conv_general_dilated(x, p["w"], (stride, stride), [(pad, pad)] * 2,
                                     dimension_numbers=("NCHW", "OIHW", "NCHW"))
    y = _ref_bn_prelu(y + p["b"][None, :, None, None], p)

    p = params["convt"]
    w_eq = jnp.transpose(jnp.flip(p["w"], (2, 3)), (1, 0, 2, 3))   # [Cout,Cin,kh,kw]
    ep = k - 1 - pad
    y = jax.lax.conv_general_dilated(y, w_eq, (1, 1), [(ep, ep)] * 2,
                                     lhs_dilation=(stride, stride),
                                     dimension_numbers=("NCHW", "OIHW", "NCHW"))
    y = _ref_bn_prelu(y + p["b"][None, :, None, None], p)

    H, W = x.shape[-2:]
    oh, ow = y.shape[-2:]
    hd, wd = H - oh, W - ow
    if hd != 0 or wd != 0:
        # reproduces the original module's F.pad ordering quirk (square maps: identical)
        y = jnp.pad(y, ((0, 0), (0, 0), (wd // 2, wd - wd // 2), (hd // 2, hd - hd // 2)),
                    mode="edge")
    return jnp.concatenate([x, y], axis=1)


# ---------------------------------- main --------------------------------------- #
if __name__ == "__main__":
    key = jax.random.PRNGKey(0)
    kx, kp = jax.random.split(key)

    N, H, W = 2, 16, 16
    inner_nc, outer_nc = 8, 4
    input_nc = outer_nc                 # input_nc=None -> outer_nc

    x = jax.random.normal(kx, (N, input_nc, H, W), jnp.float32)
    params = init_params(kp, input_nc, inner_nc, outer_nc, K)
    prep = prepare_params(params, H, W)

    fwd = jax.jit(unet_block_forward)
    out = jax.block_until_ready(fwd(x, prep))

    ref = reference_forward(x, params, K, STRIDE, PAD)
    assert out.shape == (N, input_nc + outer_nc, H, W), out.shape
    assert jnp.allclose(out, ref, atol=1e-3, rtol=1e-3), float(jnp.max(jnp.abs(out - ref)))

    print("KERNEL_OK")
</pallas_src>

<mosaic_0001>
module attributes {stable_mosaic.version = 11 : i64} {
  func.func @_unet_fused_kernel(%arg0: i32, %arg1: memref<1x4x256xf32, #tpu.memory_space<vmem>>, %arg2: memref<1x36x64xf32, #tpu.memory_space<vmem>>, %arg3: memref<8x36xf32, #tpu.memory_space<vmem>>, %arg4: memref<8x2xf32, #tpu.memory_space<vmem>>, %arg5: memref<16x32xf32, #tpu.memory_space<vmem>>, %arg6: memref<4x2xf32, #tpu.memory_space<vmem>>, %arg7: memref<4x64x256xf32, #tpu.memory_space<vmem>>, %arg8: memref<1x8x256xf32, #tpu.memory_space<vmem>>, %arg9: memref<8x128xf32, #tpu.memory_space<vmem>>) attributes {dimension_semantics = [#tpu.dimension_semantics<parallel>], iteration_bounds = array<i64: 2>, scalar_prefetch = 0 : i64, scratch_operands = 1 : i64, tpu.core_type = #tpu.core_type<tc>, window_params = [{transform_indices = @transform_0, window_bounds = array<i64: 1, 4, 256>}, {transform_indices = @transform_1, window_bounds = array<i64: 1, 36, 64>}, {pipeline_mode = #tpu.pipeline_mode<synchronous>, transform_indices = @transform_2, window_bounds = array<i64: 8, 36>}, {pipeline_mode = #tpu.pipeline_mode<synchronous>, transform_indices = @transform_3, window_bounds = array<i64: 8, 2>}, {pipeline_mode = #tpu.pipeline_mode<synchronous>, transform_indices = @transform_4, window_bounds = array<i64: 16, 32>}, {pipeline_mode = #tpu.pipeline_mode<synchronous>, transform_indices = @transform_5, window_bounds = array<i64: 4, 2>}, {pipeline_mode = #tpu.pipeline_mode<synchronous>, transform_indices = @transform_6, window_bounds = array<i64: 4, 64, 256>}, {transform_indices = @transform_7, window_bounds = array<i64: 1, 8, 256>}]} {
    %c0 = arith.constant 0 : index
    %c0_0 = arith.constant 0 : index
    %0 = vector.load %arg3[%c0, %c0_0] : memref<8x36xf32, #tpu.memory_space<vmem>>, vector<8x36xf32>
    %c0_1 = arith.constant 0 : index
    %c0_2 = arith.constant 0 : index
    %c0_3 = arith.constant 0 : index
    %1 = vector.load %arg2[%c0_1, %c0_2, %c0_3] : memref<1x36x64xf32, #tpu.memory_space<vmem>>, vector<1x36x64xf32>
    %2 = vector.shape_cast %1 : vector<1x36x64xf32> to vector<36x64xf32>
    %cst = arith.constant dense<0.000000e+00> : vector<8x64xf32>
    %3 = tpu.matmul %0, %2, %cst {dimension_numbers = #tpu.dot_dimension_numbers<[1], [0], [0], [1], [0, 0, 1, 1], [], []>} : vector<8x36xf32>, vector<36x64xf32>, vector<8x64xf32> -> vector<8x64xf32>
    %c0_4 = arith.constant 0 : index
    %c0_5 = arith.constant 0 : index
    %4 = vector.load %arg4[%c0_4, %c0_5] : memref<8x2xf32, #tpu.memory_space<vmem>>, vector<8x1xf32>
    %5 = vector.broadcast %4 : vector<8x1xf32> to vector<8x64xf32>
    %6 = arith.addf %3, %5 : vector<8x64xf32>
    %cst_6 = arith.constant 0.000000e+00 : f32
    %7 = vector.broadcast %cst_6 : f32 to vector<8x64xf32>
    %8 = arith.cmpf oge, %6, %7 : vector<8x64xf32>
    %c0_7 = arith.constant 0 : index
    %c1 = arith.constant 1 : index
    %9 = vector.load %arg4[%c0_7, %c1] : memref<8x2xf32, #tpu.memory_space<vmem>>, vector<8x1xf32>
    %10 = vector.broadcast %9 : vector<8x1xf32> to vector<8x64xf32>
    %11 = arith.mulf %10, %6 : vector<8x64xf32>
    %12 = arith.select %8, %6, %11 : vector<8x64xi1>, vector<8x64xf32>
    %c0_8 = arith.constant 0 : index
    %c0_9 = arith.constant 0 : index
    %13 = vector.load %arg9[%c0_8, %c0_9] : memref<8x128xf32, #tpu.memory_space<vmem>>, vector<8x64xf32>
    tpu.vector_store %arg9[%c0_8, %c0_9], %12 {strides = array<i32>} : memref<8x128xf32, #tpu.memory_space<vmem>>, vector<8x64xf32>,
    %cst_10 = arith.constant 0.000000e+00 : f32
    %14 = vector.broadcast %cst_10 : f32 to vector<8x64xf32>
    %c0_11 = arith.constant 0 : index
    %c64 = arith.constant 64 : index
    %15 = vector.load %arg9[%c0_11, %c64] : memref<8x128xf32, #tpu.memory_space<vmem>>, vector<8x64xf32>
    tpu.vector_store %arg9[%c0_11, %c64], %14 {strides = array<i32>} : memref<8x128xf32, #tpu.memory_space<vmem>>, vector<8x64xf32>,
    %16 = tpu.iota {dimensions = array<i32: 1>} : vector<8x64xi32>
    %c7_i32 = arith.constant 7 : i32
    %17 = vector.broadcast %c7_i32 : i32 to vector<8x64xi32>
    %18 = arith.andi %16, %17 : vector<8x64xi32>
    %c7_i32_12 = arith.constant 7 : i32
    %19 = vector.broadcast %c7_i32_12 : i32 to vector<8x64xi32>
    %20 = arith.cmpi eq, %18, %19 : vector<8x64xi32>
    %c0_13 = arith.constant 0 : index
    %c1_14 = arith.constant 1 : index
    %21 = vector.load %arg9[%c0_13, %c1_14] : memref<8x128xf32, #tpu.memory_space<vmem>>, vector<8x64xf32>
    %cst_15 = arith.constant 0.000000e+00 : f32
    %22 = vector.broadcast %cst_15 : f32 to vector<8x64xf32>
    %23 = arith.select %20, %22, %21 : vector<8x64xi1>, vector<8x64xf32>
    %c0_16 = arith.constant 0 : index
    %c8 = arith.constant 8 : index
    %24 = vector.load %arg9[%c0_16, %c8] : memref<8x128xf32, #tpu.memory_space<vmem>>, vector<8x64xf32>
    %c0_17 = arith.constant 0 : index
    %c9 = arith.constant 9 : index
    %25 = vector.load %arg9[%c0_17, %c9] : memref<8x128xf32, #tpu.memory_space<vmem>>, vector<8x64xf32>
    %cst_18 = arith.constant 0.000000e+00 : f32
    %26 = vector.broadcast %cst_18 : f32 to vector<8x64xf32>
    %27 = arith.select %20, %26, %25 : vector<8x64xi1>, vector<8x64xf32>
    %28 = tpu.concatenate %12, %23, %24, %27 in 0 : vector<8x64xf32>, vector<8x64xf32>, vector<8x64xf32>, vector<8x64xf32> -> vector<32x64xf32>
    %c0_19 = arith.constant 0 : index
    %c0_20 = arith.constant 0 : index
    %29 = vector.load %arg5[%c0_19, %c0_20] : memref<16x32xf32, #tpu.memory_space<vmem>>, vector<16x32xf32>
    %cst_21 = arith.constant dense<0.000000e+00> : vector<16x64xf32>
    %30 = tpu.matmul %29, %28, %cst_21 {dimension_numbers = #tpu.dot_dimension_numbers<[1], [0], [0], [1], [0, 0, 1, 1], [], []>} : vector<16x32xf32>, vector<32x64xf32>, vector<16x64xf32> -> vector<16x64xf32>
    %31 = vector.extract_strided_slice %30 {offsets = [0, 0], sizes = [4, 64], strides = [1, 1]} : vector<16x64xf32> to vector<4x64xf32>
    %c0_22 = arith.constant 0 : index
    %c0_23 = arith.constant 0 : index
    %c0_24 = arith.constant 0 : index
    %32 = vector.load %arg7[%c0_22, %c0_23, %c0_24] : memref<4x64x256xf32, #tpu.memory_space<vmem>>, vector<1x64x256xf32>
    %33 = vector.shape_cast %32 : vector<1x64x256xf32> to vector<64x256xf32>
    %cst_25 = arith.constant dense<0.000000e+00> : vector<4x256xf32>
    %34 = tpu.matmul %31, %33, %cst_25 {dimension_numbers = #tpu.dot_dimension_numbers<[1], [0], [0], [1], [0, 0, 1, 1], [], []>} : vector<4x64xf32>, vector<64x256xf32>, vector<4x256xf32> -> vector<4x256xf32>
    %35 = vector.extract_strided_slice %30 {offsets = [4, 0], sizes = [4, 64], strides = [1, 1]} : vector<16x64xf32> to vector<4x64xf32>
    %c1_26 = arith.constant 1 : index
    %c0_27 = arith.constant 0 : index
    %c0_28 = arith.constant 0 : index
    %36 = vector.load %arg7[%c1_26, %c0_27, %c0_28] : memref<4x64x256xf32, #tpu.memory_space<vmem>>, vector<1x64x256xf32>
    %37 = vector.shape_cast %36 : vector<1x64x256xf32> to vector<64x256xf32>
    %cst_29 = arith.constant dense<0.000000e+00> : vector<4x256xf32>
    %38 = tpu.matmul %35, %37, %cst_29 {dimension_numbers = #tpu.dot_dimension_numbers<[1], [0], [0], [1], [0, 0, 1, 1], [], []>} : vector<4x64xf32>, vector<64x256xf32>, vector<4x256xf32> -> vector<4x256xf32>
    %39 = arith.addf %34, %38 : vector<4x256xf32>
    %40 = vector.extract_strided_slice %30 {offsets = [8, 0], sizes = [4, 64], strides = [1, 1]} : vector<16x64xf32> to vector<4x64xf32>
    %c2 = arith.constant 2 : index
    %c0_30 = arith.constant 0 : index
    %c0_31 = arith.constant 0 : index
    %41 = vector.load %arg7[%c2, %c0_30, %c0_31] : memref<4x64x256xf32, #tpu.memory_space<vmem>>, vector<1x64x256xf32>
    %42 = vector.shape_cast %41 : vector<1x64x256xf32> to vector<64x256xf32>
    %cst_32 = arith.constant dense<0.000000e+00> : vector<4x256xf32>
    %43 = tpu.matmul %40, %42, %cst_32 {dimension_numbers = #tpu.dot_dimension_numbers<[1], [0], [0], [1], [0, 0, 1, 1], [], []>} : vector<4x64xf32>, vector<64x256xf32>, vector<4x256xf32> -> vector<4x256xf32>
    %44 = arith.addf %39, %43 : vector<4x256xf32>
    %45 = vector.extract_strided_slice %30 {offsets = [12, 0], sizes = [4, 64], strides = [1, 1]} : vector<16x64xf32> to vector<4x64xf32>
    %c3 = arith.constant 3 : index
    %c0_33 = arith.constant 0 : index
    %c0_34 = arith.constant 0 : index
    %46 = vector.load %arg7[%c3, %c0_33, %c0_34] : memref<4x64x256xf32, #tpu.memory_space<vmem>>, vector<1x64x256xf32>
    %47 = vector.shape_cast %46 : vector<1x64x256xf32> to vector<64x256xf32>
    %cst_35 = arith.constant dense<0.000000e+00> : vector<4x256xf32>
    %48 = tpu.matmul %45, %47, %cst_35 {dimension_numbers = #tpu.dot_dimension_numbers<[1], [0], [0], [1], [0, 0, 1, 1], [], []>} : vector<4x64xf32>, vector<64x256xf32>, vector<4x256xf32> -> vector<4x256xf32>
    %49 = arith.addf %44, %48 : vector<4x256xf32>
    %c0_36 = arith.constant 0 : index
    %c0_37 = arith.constant 0 : index
    %50 = vector.load %arg6[%c0_36, %c0_37] : memref<4x2xf32, #tpu.memory_space<vmem>>, vector<4x1xf32>
    %51 = vector.broadcast %50 : vector<4x1xf32> to vector<4x256xf32>
    %52 = arith.addf %49, %51 : vector<4x256xf32>
    %cst_38 = arith.constant 0.000000e+00 : f32
    %53 = vector.broadcast %cst_38 : f32 to vector<4x256xf32>
    %54 = arith.cmpf oge, %52, %53 : vector<4x256xf32>
    %c0_39 = arith.constant 0 : index
    %c1_40 = arith.constant 1 : index
    %55 = vector.load %arg6[%c0_39, %c1_40] : memref<4x2xf32, #tpu.memory_space<vmem>>, vector<4x1xf32>
    %56 = vector.broadcast %55 : vector<4x1xf32> to vector<4x256xf32>
    %57 = arith.mulf %56, %52 : vector<4x256xf32>
    %58 = arith.select %54, %52, %57 : vector<4x256xi1>, vector<4x256xf32>
    %c0_41 = arith.constant 0 : index
    %c0_42 = arith.constant 0 : index
    %c0_43 = arith.constant 0 : index
    %59 = vector.load %arg1[%c0_41, %c0_42, %c0_43] : memref<1x4x256xf32, #tpu.memory_space<vmem>>, vector<1x4x256xf32>
    %60 = vector.shape_cast %59 : vector<1x4x256xf32> to vector<4x256xf32>
    %c0_44 = arith.constant 0 : index
    %c0_45 = arith.constant 0 : index
    %c0_46 = arith.constant 0 : index
    %61 = vector.load %arg8[%c0_44, %c0_45, %c0_46] : memref<1x8x256xf32, #tpu.memory_space<vmem>>, vector<1x4x256xf32>
    %62 = vector.shape_cast %61 : vector<1x4x256xf32> to vector<4x256xf32>
    %63 = vector.shape_cast %60 : vector<4x256xf32> to vector<1x4x256xf32>
    tpu.vector_store %arg8[%c0_44, %c0_45, %c0_46], %63 {strides = array<i32>} : memref<1x8x256xf32, #tpu.memory_space<vmem>>, vector<1x4x256xf32>,
    %c0_47 = arith.constant 0 : index
    %c4 = arith.constant 4 : index
    %c0_48 = arith.constant 0 : index
    %64 = vector.load %arg8[%c0_47, %c4, %c0_48] : memref<1x8x256xf32, #tpu.memory_space<vmem>>, vector<1x4x256xf32>
    %65 = vector.shape_cast %64 : vector<1x4x256xf32> to vector<4x256xf32>
    %66 = vector.shape_cast %58 : vector<4x256xf32> to vector<1x4x256xf32>
    tpu.vector_store %arg8[%c0_47, %c4, %c0_48], %66 {strides = array<i32>} : memref<1x8x256xf32, #tpu.memory_space<vmem>>, vector<1x4x256xf32>,
    return
  }
  func.func @transform_0(%arg0: i32) -> (i32, i32, i32) {
    %c0_i32 = arith.constant 0 : i32
    %c0_i32_0 = arith.constant 0 : i32
    %c0_i32_1 = arith.constant 0 : i32
    return %arg0, %c0_i32, %c0_i32_0 : i32, i32, i32
  }
  func.func @transform_1(%arg0: i32) -> (i32, i32, i32) {
    %c0_i32 = arith.constant 0 : i32
    %c0_i32_0 = arith.constant 0 : i32
    %c0_i32_1 = arith.constant 0 : i32
    return %arg0, %c0_i32, %c0_i32_0 : i32, i32, i32
  }
  func.func @transform_2(%arg0: i32) -> (i32, i32) {
    %c0_i32 = arith.constant 0 : i32
    %c0_i32_0 = arith.constant 0 : i32
    %c0_i32_1 = arith.constant 0 : i32
    return %c0_i32, %c0_i32_0 : i32, i32
  }
  func.func @transform_3(%arg0: i32) -> (i32, i32) {
    %c0_i32 = arith.constant 0 : i32
    %c0_i32_0 = arith.constant 0 : i32
    %c0_i32_1 = arith.constant 0 : i32
    return %c0_i32, %c0_i32_0 : i32, i32
  }
  func.func @transform_4(%arg0: i32) -> (i32, i32) {
    %c0_i32 = arith.constant 0 : i32
    %c0_i32_0 = arith.constant 0 : i32
    %c0_i32_1 = arith.constant 0 : i32
    return %c0_i32, %c0_i32_0 : i32, i32
  }
  func.func @transform_5(%arg0: i32) -> (i32, i32) {
    %c0_i32 = arith.constant 0 : i32
    %c0_i32_0 = arith.constant 0 : i32
    %c0_i32_1 = arith.constant 0 : i32
    return %c0_i32, %c0_i32_0 : i32, i32
  }
  func.func @transform_6(%arg0: i32) -> (i32, i32, i32) {
    %c0_i32 = arith.constant 0 : i32
    %c0_i32_0 = arith.constant 0 : i32
    %c0_i32_1 = arith.constant 0 : i32
    %c0_i32_2 = arith.constant 0 : i32
    return %c0_i32, %c0_i32_0, %c0_i32_1 : i32, i32, i32
  }
  func.func @transform_7(%arg0: i32) -> (i32, i32, i32) {
    %c0_i32 = arith.constant 0 : i32
    %c0_i32_0 = arith.constant 0 : i32
    %c0_i32_1 = arith.constant 0 : i32
    return %arg0, %c0_i32, %c0_i32_0 : i32, i32, i32
  }
}

</mosaic_0001>

<llo_original>
// kernel: unet_block_forward.1
$region0: #{unet_block_forward.1}
  #allocation0 [shape = 'u32[]', space=smem, size = 0x4, offset = 0x4, fixed_abs, tag = 'smem constant byte address 0x4 - core index']
  #allocation1 [shape = 'u32[72,128]{1,0:T(1,128)}', space=vmem, size = 0x9000, scoped, tag = 'internal scratch']
  #allocation2 [shape = 'f32[8,128]{1,0:T(8,128)}', space=vmem, size = 0x1000, scoped, tag = 'scratch operand']
  %s0 = inlined_call_operand.vmem [shape: f32[2,4,256], index: 0, kind: input, shape index: {}]
  %s1 = inlined_call_operand.vmem [shape: f32[2,36,64], index: 1, kind: input, shape index: {}]
  %s2 = inlined_call_operand.vmem [shape: f32[8,36], index: 2, kind: input, shape index: {}]
  %s3 = inlined_call_operand.vmem [shape: f32[8,2], index: 3, kind: input, shape index: {}]
  %s4 = inlined_call_operand.vmem [shape: f32[16,32], index: 4, kind: input, shape index: {}]
  %s5 = inlined_call_operand.vmem [shape: f32[4,2], index: 5, kind: input, shape index: {}]
  %s6 = inlined_call_operand.vmem [shape: f32[4,64,256], index: 6, kind: input, shape index: {}]
  %s7 = inlined_call_operand.vmem [shape: f32[2,8,256], index: 7, kind: output, shape index: {}]
  %s8 = sld [smem:[#allocation0]]
  $region61: #{unet_block_forward.1} parent=0
    _
  %s10 = ssub.s32 1, %s8
  %s11 = scalar_select 0, %s10, %s8
  loop: start=0, step=1, limit=4
  $region2: #{unet_block_forward.1} parent=0 // loop_pre_header
    _
  $region3: #{unet_block_forward.1} parent=0 // loop_header
    %s13 = sphi 0, %s17
    %p14 = scmp.ge.s32.totalorder %s13, 4
    %s23 = sphi 0, %s25
    %s26 = sphi 0, %s23
    %s27 = sphi 0, %s26
    %s43 = sphi 0, %s27
    %s49 = sphi 0, %s51
    %s52 = sphi 0, %s49
    %s53 = sphi 0, %s52
    %s69 = sphi 0, %s53
    %s73 = sphi 0, %s73
    %s75 = sphi 0, %s73
    %s76 = sphi 0, %s75
    %s90 = sphi 0, %s76
    %s94 = sphi 0, %s94
    %s96 = sphi 0, %s94
    %s97 = sphi 0, %s96
    %s111 = sphi 0, %s97
    %s115 = sphi 0, %s115
    %s117 = sphi 0, %s115
    %s118 = sphi 0, %s117
    %s132 = sphi 0, %s118
    %s136 = sphi 0, %s136
    %s138 = sphi 0, %s136
    %s139 = sphi 0, %s138
    %s153 = sphi 0, %s139
    %s157 = sphi 0, %s157
    %s159 = sphi 0, %s157
    %s160 = sphi 0, %s159
    %s174 = sphi 0, %s160
    %s180 = sphi 0, %s182
    %s183 = sphi 0, %s180
    %s184 = sphi 0, %s183
    %s200 = sphi 0, %s184
  $region4: #{unet_block_forward.1} parent=0 // loop_header_branch
    %16 = sbr.rel (%p14) target = $region8
  $region5: #{unet_block_forward.1} parent=0 // loop_body
    %s18 = ssub.s32 %s13, 1
    %s19 = ssub.s32 %s13, 2
    %s20 = sadd.s32 %s13, 1
    %s21 = ssub.s32 %s13, %s20
    %p22 = scmp.eq.s32.totalorder %s21, 0
    %s24 = sadd.s32 %s23, 1
    %s25 = scalar_select %p22, %s23, %s24
    %p28 = pneg %p22
    %p29 = scmp.eq.s32.totalorder %s13, 1
    %p30 = por %p28, %p29
    %p31 = scmp.ne.s32.totalorder %s23, %s26
    %p32 = scmp.eq.s32.totalorder %s13, 0
    %p33 = por %p31, %p32
    %p34 = scmp.ne.s32.totalorder %s23, %s26
    %p35 = scmp.eq.s32.totalorder %s18, 1
    %p36 = por %p34, %p35
    %p37 = scmp.ne.s32.totalorder %s26, %s27
    %p38 = scmp.eq.s32.totalorder %s18, 0
    %p39 = por %p37, %p38
    %p40 = scmp.ne.s32.totalorder %s26, %s27
    %p41 = scmp.eq.s32.totalorder %s19, 1
    %p42 = por %p40, %p41
    %p44 = scmp.ne.s32.totalorder %s27, %s43
    %p45 = scmp.eq.s32.totalorder %s19, 0
    %p46 = por %p44, %p45
    %s47 = ssub.s32 %s13, %s20
    %p48 = scmp.eq.s32.totalorder %s47, 0
    %s50 = sadd.s32 %s49, 1
    %s51 = scalar_select %p48, %s49, %s50
    %p54 = pneg %p48
    %p55 = scmp.eq.s32.totalorder %s13, 1
    %p56 = por %p54, %p55
    %p57 = scmp.ne.s32.totalorder %s49, %s52
    %p58 = scmp.eq.s32.totalorder %s13, 0
    %p59 = por %p57, %p58
    %p60 = scmp.ne.s32.totalorder %s49, %s52
    %p61 = scmp.eq.s32.totalorder %s18, 1
    %p62 = por %p60, %p61
    %p63 = scmp.ne.s32.totalorder %s52, %s53
    %p64 = scmp.eq.s32.totalorder %s18, 0
    %p65 = por %p63, %p64
    %p66 = scmp.ne.s32.totalorder %s52, %s53
    %p67 = scmp.eq.s32.totalorder %s19, 1
    %p68 = por %p66, %p67
    %p70 = scmp.ne.s32.totalorder %s53, %s69
    %p71 = scmp.eq.s32.totalorder %s19, 0
    %p72 = por %p70, %p71
    %s74 = sadd.s32 %s73, 1
    %p77 = scmp.eq.s32.totalorder %s13, 1
    %p78 = scmp.ne.s32.totalorder %s73, %s75
    %p79 = scmp.eq.s32.totalorder %s13, 0
    %p80 = por %p78, %p79
    %p81 = scmp.ne.s32.totalorder %s73, %s75
    %p82 = scmp.eq.s32.totalorder %s18, 1
    %p83 = por %p81, %p82
    %p84 = scmp.ne.s32.totalorder %s75, %s76
    %p85 = scmp.eq.s32.totalorder %s18, 0
    %p86 = por %p84, %p85
    %p87 = scmp.ne.s32.totalorder %s75, %s76
    %p88 = scmp.eq.s32.totalorder %s19, 1
    %p89 = por %p87, %p88
    %p91 = scmp.ne.s32.totalorder %s76, %s90
    %p92 = scmp.eq.s32.totalorder %s19, 0
    %p93 = por %p91, %p92
    %s95 = sadd.s32 %s94, 1
    %p98 = scmp.eq.s32.totalorder %s13, 1
    %p99 = scmp.ne.s32.totalorder %s94, %s96
    %p100 = scmp.eq.s32.totalorder %s13, 0
    %p101 = por %p99, %p100
    %p102 = scmp.ne.s32.totalorder %s94, %s96
    %p103 = scmp.eq.s32.totalorder %s18, 1
    %p104 = por %p102, %p103
    %p105 = scmp.ne.s32.totalorder %s96, %s97
    %p106 = scmp.eq.s32.totalorder %s18, 0
    %p107 = por %p105, %p106
    %p108 = scmp.ne.s32.totalorder %s96, %s97
    %p109 = scmp.eq.s32.totalorder %s19, 1
    %p110 = por %p108, %p109
    %p112 = scmp.ne.s32.totalorder %s97, %s111
    %p113 = scmp.eq.s32.totalorder %s19, 0
    %p114 = por %p112, %p113
    %s116 = sadd.s32 %s115, 1
    %p119 = scmp.eq.s32.totalorder %s13, 1
    %p120 = scmp.ne.s32.totalorder %s115, %s117
    %p121 = scmp.eq.s32.totalorder %s13, 0
    %p122 = por %p120, %p121
    %p123 = scmp.ne.s32.totalorder %s115, %s117
    %p124 = scmp.eq.s32.totalorder %s18, 1
    %p125 = por %p123, %p124
    %p126 = scmp.ne.s32.totalorder %s117, %s118
    %p127 = scmp.eq.s32.totalorder %s18, 0
    %p128 = por %p126, %p127
    %p129 = scmp.ne.s32.totalorder %s117, %s118
    %p130 = scmp.eq.s32.totalorder %s19, 1
    %p131 = por %p129, %p130
    %p133 = scmp.ne.s32.totalorder %s118, %s132
    %p134 = scmp.eq.s32.totalorder %s19, 0
    %p135 = por %p133, %p134
    %s137 = sadd.s32 %s136, 1
    %p140 = scmp.eq.s32.totalorder %s13, 1
    %p141 = scmp.ne.s32.totalorder %s136, %s138
    %p142 = scmp.eq.s32.totalorder %s13, 0
    %p143 = por %p141, %p142
    %p144 = scmp.ne.s32.totalorder %s136, %s138
    %p145 = scmp.eq.s32.totalorder %s18, 1
    %p146 = por %p144, %p145
    %p147 = scmp.ne.s32.totalorder %s138, %s139
    %p148 = scmp.eq.s32.totalorder %s18, 0
    %p149 = por %p147, %p148
    %p150 = scmp.ne.s32.totalorder %s138, %s139
    %p151 = scmp.eq.s32.totalorder %s19, 1
    %p152 = por %p150, %p151
    %p154 = scmp.ne.s32.totalorder %s139, %s153
    %p155 = scmp.eq.s32.totalorder %s19, 0
    %p156 = por %p154, %p155
    %s158 = sadd.s32 %s157, 1
    %p161 = scmp.eq.s32.totalorder %s13, 1
    %p162 = scmp.ne.s32.totalorder %s157, %s159
    %p163 = scmp.eq.s32.totalorder %s13, 0
    %p164 = por %p162, %p163
    %p165 = scmp.ne.s32.totalorder %s157, %s159
    %p166 = scmp.eq.s32.totalorder %s18, 1
    %p167 = por %p165, %p166
    %p168 = scmp.ne.s32.totalorder %s159, %s160
    %p169 = scmp.eq.s32.totalorder %s18, 0
    %p170 = por %p168, %p169
    %p171 = scmp.ne.s32.totalorder %s159, %s160
    %p172 = scmp.eq.s32.totalorder %s19, 1
    %p173 = por %p171, %p172
    %p175 = scmp.ne.s32.totalorder %s160, %s174
    %p176 = scmp.eq.s32.totalorder %s19, 0
    %p177 = por %p175, %p176
    %s178 = ssub.s32 %s13, %s20
    %p179 = scmp.eq.s32.totalorder %s178, 0
    %s181 = sadd.s32 %s180, 1
    %s182 = scalar_select %p179, %s180, %s181
    %p185 = pneg %p179
    %p186 = scmp.eq.s32.totalorder %s13, 1
    %p187 = por %p185, %p186
    %p188 = scmp.ne.s32.totalorder %s180, %s183
    %p189 = scmp.eq.s32.totalorder %s13, 0
    %p190 = por %p188, %p189
    %p191 = scmp.ne.s32.totalorder %s180, %s183
    %p192 = scmp.eq.s32.totalorder %s18, 1
    %p193 = por %p191, %p192
    %p194 = scmp.ne.s32.totalorder %s183, %s184
    %p195 = scmp.eq.s32.totalorder %s18, 0
    %p196 = por %p194, %p195
    %p197 = scmp.ne.s32.totalorder %s183, %s184
    %p198 = scmp.eq.s32.totalorder %s19, 1
    %p199 = por %p197, %p198
    %p201 = scmp.ne.s32.totalorder %s184, %s200
    %p202 = scmp.eq.s32.totalorder %s19, 0
    %p203 = por %p201, %p202
    %p204 = scmp.le.s32.totalorder 1, %s13
    %p205 = scmp.lt.s32.totalorder %s13, 3
    %p206 = pnand %p204, %p205
    %p207 = pneg %p206
    // Predicated region
    $region9: #{unet_block_forward.1} parent=5 // pred_check
      _
    $region10: #{unet_block_forward.1} parent=5 // pred_check_branch
      %209 = sbr.rel (%p206) target = $region12
    $region11: #{unet_block_forward.1} parent=5 // pred_region
      %s210 = ssub.s32 %s13, 1
      // Predicated region
      $region13: #{unet_block_forward.1} parent=11 // pred_check
        %p211 = pneg %p86
      $region14: #{unet_block_forward.1} parent=11 // pred_check_branch
        %213 = sbr.rel (%p211) target = $region16
      $region15: #{unet_block_forward.1} parent=11 // pred_region
        _
      $region16: #{unet_block_forward.1} parent=11 // pred_fallthru
        _
      // Predicated region
      $region17: #{unet_block_forward.1} parent=11 // pred_check
        %p214 = pneg %p107
      $region18: #{unet_block_forward.1} parent=11 // pred_check_branch
        %216 = sbr.rel (%p214) target = $region20
      $region19: #{unet_block_forward.1} parent=11 // pred_region
        _
      $region20: #{unet_block_forward.1} parent=11 // pred_fallthru
        _
      // Predicated region
      $region21: #{unet_block_forward.1} parent=11 // pred_check
        %p217 = pneg %p128
      $region22: #{unet_block_forward.1} parent=11 // pred_check_branch
        %219 = sbr.rel (%p217) target = $region24
      $region23: #{unet_block_forward.1} parent=11 // pred_region
        _
      $region24: #{unet_block_forward.1} parent=11 // pred_fallthru
        _
      // Predicated region
      $region25: #{unet_block_forward.1} parent=11 // pred_check
        %p220 = pneg %p149
      $region26: #{unet_block_forward.1} parent=11 // pred_check_branch
        %222 = sbr.rel (%p220) target = $region28
      $region27: #{unet_block_forward.1} parent=11 // pred_region
        _
      $region28: #{unet_block_forward.1} parent=11 // pred_fallthru
        _
      // Predicated region
      $region29: #{unet_block_forward.1} parent=11 // pred_check
        %p223 = pneg %p170
      $region30: #{unet_block_forward.1} parent=11 // pred_check_branch
        %225 = sbr.rel (%p223) target = $region32
      $region31: #{unet_block_forward.1} parent=11 // pred_region
        _
      $region32: #{unet_block_forward.1} parent=11 // pred_fallthru
        _
    $region12: #{unet_block_forward.1} parent=5 // pred_fallthru
      _
    %p226 = scmp.lt.s32.totalorder %s13, 2
    // Predicated region
    $region33: #{unet_block_forward.1} parent=5 // pred_check
      %p227 = pneg %p226
    $region34: #{unet_block_forward.1} parent=5 // pred_check_branch
      %229 = sbr.rel (%p227) target = $region36
    $region35: #{unet_block_forward.1} parent=5 // pred_region
      // Predicated region
      $region37: #{unet_block_forward.1} parent=35 // pred_check
        %p230 = pneg %p33
      $region38: #{unet_block_forward.1} parent=35 // pred_check_branch
        %232 = sbr.rel (%p230) target = $region40
      $region39: #{unet_block_forward.1} parent=35 // pred_region
        %p233 = scmp.lt.s32.totalorder %s13, 1
        %s234 = scalar_select %p233, %s13, 1
        %s235 = smul.addr %s234, 2
        %s236 = smul.addr %s235, 4
        %s237 = scalar_lea.vmem %s0, %s236
      $region40: #{unet_block_forward.1} parent=35 // pred_fallthru
        _
      // Predicated region
      $region41: #{unet_block_forward.1} parent=35 // pred_check
        %p238 = pneg %p59
      $region42: #{unet_block_forward.1} parent=35 // pred_check_branch
        %240 = sbr.rel (%p238) target = $region44
      $region43: #{unet_block_forward.1} parent=35 // pred_region
        %p241 = scmp.lt.s32.totalorder %s13, 1
        %s242 = scalar_select %p241, %s13, 1
        %s243 = smul.addr %s242, 5
        %s244 = smul.addr %s243, 8
        %s245 = scalar_lea.vmem %s1, %s244
      $region44: #{unet_block_forward.1} parent=35 // pred_fallthru
        _
    $region36: #{unet_block_forward.1} parent=5 // pred_fallthru
      _
    %p246 = scmp.le.s32.totalorder 1, %s13
    %p247 = scmp.lt.s32.totalorder %s13, 3
    %p248 = pnand %p246, %p247
    %p249 = pneg %p248
    // Predicated region
    $region45: #{unet_block_forward.1} parent=5 // pred_check
      _
    $region46: #{unet_block_forward.1} parent=5 // pred_check_branch
      %251 = sbr.rel (%p248) target = $region48
    $region47: #{unet_block_forward.1} parent=5 // pred_region
      %s252 = ssub.s32 %s13, 1
      %p253 = scmp.lt.s32.totalorder %s18, 1
      %s254 = scalar_select %p253, %s18, 1
      %s255 = smul.addr %s254, 2
      %s256 = smul.addr %s255, 4
      %s257 = scalar_lea.vmem %s0, %s256
      %p258 = pneg %p39
      %p259 = pneg %p36
      %p260 = scmp.lt.s32.totalorder %s18, 1
      %s261 = scalar_select %p260, %s18, 1
      %s262 = smul.addr %s261, 5
      %s263 = smul.addr %s262, 8
      %s264 = scalar_lea.vmem %s1, %s263
      %p265 = pneg %p65
      %p266 = pneg %p62
      %p267 = pneg %p86
      %p268 = pneg %p83
      %p269 = pneg %p107
      %p270 = pneg %p104
      %p271 = pneg %p128
      %p272 = pneg %p125
      %p273 = pneg %p149
      %p274 = pneg %p146
      %p275 = pneg %p170
      %p276 = pneg %p167
      %p277 = pneg %p196
      %p278 = pneg %p193
      %p279 = scmp.lt.s32.totalorder %s18, 1
      %s280 = scalar_select %p279, %s18, 1
      %s281 = smul.addr %s280, 2
      %s282 = smul.addr %s281, 8
      %s283 = scalar_lea.vmem %s7, %s282
      %p284 = scmp.lt.s32.totalorder %s18, 1
      %s285 = scalar_select %p284, %s18, 1
      %s286 = smul.addr %s285, 2
      %s287 = smul.addr %s286, 4
      %s288 = scalar_lea.vmem %s0, %s287
      %p289 = scmp.lt.s32.totalorder %s18, 1
      %s290 = scalar_select %p289, %s18, 1
      %s291 = smul.addr %s290, 5
      %s292 = smul.addr %s291, 8
      %s293 = scalar_lea.vmem %s1, %s292
      %p294 = scmp.lt.s32.totalorder %s18, 1
      %s295 = scalar_select %p294, %s18, 1
      %s296 = smul.addr %s295, 2
      %s297 = smul.addr %s296, 8
      %s298 = scalar_lea.vmem %s7, %s297
      %v299 = vld [vmem:[%s2] sm:$0xff]
      %v300 = vld [vmem:[%s293] sm:$0xff]
      %v301 = vld [vmem:[%s293 + $0x8] sm:$0xff]
      %v302 = vld [vmem:[%s293 + $0x10] sm:$0xff]
      %v303 = vld [vmem:[%s293 + $0x18] sm:$0xff]
      %v304 = vld [vmem:[%s293 + $0x20] sm:$0xf]
      %v305 = vld [vmem:[%s3] sm:$0xff]
      %307 = vset.pattern.permute.xlu0 0
      %308 = vperm.xlu0 %307, %v305
      %v309 = vpop.permute.xlu0 %308
      %vm311 = vcmask 293888
      %v313 = vsel %vm311, %v299, 0
      %vm315 = vcmask 1043456
      %v317 = vsel %vm315, %v304, 0
      %319 = vmatpush.msra.mxu0 0.0
      %320 = vmatpush.msra.mxu0 0.0
      %321 = vmatpush.msra.mxu0 0.0
      %322 = vmatpush.msra.mxu0 0.0
      %323 = vmatpush.msra.mxu0 0.0
      %324 = vmatpush.msra.mxu0 0.0
      %325 = vmatpush.msra.mxu0 0.0
      %326 = vmatpush.msra.mxu0 0.0
      %327 = vmatpush.msra.mxu0 0.0
      %328 = vmatpush.msra.mxu0 0.0
      %329 = vmatpush.msra.mxu0 0.0
      %330 = vmatpush.msra.mxu0 %v317
      %331 = vmatpush.msra.mxu0 %v303
      %332 = vmatpush.msra.mxu0 %v302
      %333 = vmatpush.msra.mxu0 %v301
      %334 = vmatpush.msra.mxu0 %v300
      %335 = vmatmul.f32.gmra.mxu0 %v313
      %v336 = vpop.f32.mrf.mxu0
      %v337 = vadd.f32 %v309, %v336
      %338 = vdwg.mxu0
      %vm339 = vcmp.ge.f32.partialorder %v337, 0.0
      %340 = vset.pattern.permute.xlu0 1
      %341 = vperm.xlu0 %340, %v305
      %v342 = vpop.permute.xlu0 %341
      %v344 = vmul.f32 %v342, %v337
      %v345 = vsel %vm339, %v337, %v344
      %vm346 = vcmask 523264
      %347 = vst.msk [vmem:[#allocation2] sm:$0xff] %vm346, %v345
      %vm348 = vcmask 1048064
      %349 = vst.msk [vmem:[#allocation2] sm:$0xff] %vm348, 0.0
      %v350 = vlaneseq
      %v351 = vand.u32 %v350, 127
      %v352 = vand.u32 %v351, 7
      %vm353 = vcmp.eq.s32.totalorder %v352, 7
      %v354 = vld [vmem:[#allocation2] sm:$0xff]
      %356 = vrot.lane.b32.xlu0 %v354, 127
      %v357 = vpop.permute.xlu0 %356
      %v359 = vsel %vm353, 0.0, %v357
      %360 = vrot.lane.b32.xlu0 %v354, 119
      %v361 = vpop.permute.xlu0 %360
      %v363 = vsel %vm353, 0.0, %v361
      %364 = vrot.lane.b32.xlu0 %v354, 120
      %v365 = vpop.permute.xlu0 %364
      %v367 = vld [vmem:[%s4] sm:$0xff]
      %v368 = vld [vmem:[%s4 + $0x8] sm:$0xff]
      %vm369 = vcmask 261120
      %v371 = vsel %vm369, %v367, 0
      %v374 = vsel %vm369, %v368, 0
      %376 = vmatpush.msra.mxu0 0.0
      %377 = vmatpush.msra.mxu0 0.0
      %378 = vmatpush.msra.mxu0 0.0
      %379 = vmatpush.msra.mxu0 0.0
      %380 = vmatpush.msra.mxu0 0.0
      %381 = vmatpush.msra.mxu0 0.0
      %382 = vmatpush.msra.mxu0 0.0
      %383 = vmatpush.msra.mxu0 0.0
      %384 = vmatpush.msra.mxu0 0.0
      %385 = vmatpush.msra.mxu0 0.0
      %386 = vmatpush.msra.mxu0 0.0
      %387 = vmatpush.msra.mxu0 0.0
      %388 = vmatpush.msra.mxu0 %v363
      %389 = vmatpush.msra.mxu0 %v365
      %390 = vmatpush.msra.mxu0 %v359
      %391 = vmatpush.msra.mxu0 %v345
      %392 = vmatmul.f32.gmra.mxu0 %v371
      %v393 = vpop.f32.mrf.mxu0
      %v394 = vadd.f32 0.0, %v393
      %395 = vmatmul.f32.gmra.mxu0 %v374
      %v396 = vpop.f32.mrf.mxu0
      %v397 = vadd.f32 0.0, %v396
      %398 = vdwg.mxu0
      %v399 = vld [vmem:[%s6] sm:$0xff]
      %v400 = vld [vmem:[%s6 + $0x8] sm:$0xff]
      %v401 = vld [vmem:[%s6 + $0x10] sm:$0xff]
      %v402 = vld [vmem:[%s6 + $0x18] sm:$0xff]
      %v403 = vld [vmem:[%s6 + $0x20] sm:$0xff]
      %v404 = vld [vmem:[%s6 + $0x28] sm:$0xff]
      %v405 = vld [vmem:[%s6 + $0x30] sm:$0xff]
      %v406 = vld [vmem:[%s6 + $0x38] sm:$0xff]
      %v407 = vld [vmem:[%s6 + $0x40] sm:$0xff]
      %v408 = vld [vmem:[%s6 + $0x48] sm:$0xff]
      %v409 = vld [vmem:[%s6 + $0x50] sm:$0xff]
      %v410 = vld [vmem:[%s6 + $0x58] sm:$0xff]
      %v411 = vld [vmem:[%s6 + $0x60] sm:$0xff]
      %v412 = vld [vmem:[%s6 + $0x68] sm:$0xff]
      %v413 = vld [vmem:[%s6 + $0x70] sm:$0xff]
      %v414 = vld [vmem:[%s6 + $0x78] sm:$0xff]
      %s415 = scalar_lea.vmem %s6, 128
      %v416 = vld [vmem:[%s415] sm:$0xff]
      %v417 = vld [vmem:[%s415 + $0x8] sm:$0xff]
      %v418 = vld [vmem:[%s415 + $0x10] sm:$0xff]
      %v419 = vld [vmem:[%s415 + $0x18] sm:$0xff]
      %v420 = vld [vmem:[%s415 + $0x20] sm:$0xff]
      %v421 = vld [vmem:[%s415 + $0x28] sm:$0xff]
      %v422 = vld [vmem:[%s415 + $0x30] sm:$0xff]
      %v423 = vld [vmem:[%s415 + $0x38] sm:$0xff]
      %v424 = vld [vmem:[%s415 + $0x40] sm:$0xff]
      %v425 = vld [vmem:[%s415 + $0x48] sm:$0xff]
      %v426 = vld [vmem:[%s415 + $0x50] sm:$0xff]
      %v427 = vld [vmem:[%s415 + $0x58] sm:$0xff]
      %v428 = vld [vmem:[%s415 + $0x60] sm:$0xff]
      %v429 = vld [vmem:[%s415 + $0x68] sm:$0xff]
      %v430 = vld [vmem:[%s415 + $0x70] sm:$0xff]
      %v431 = vld [vmem:[%s415 + $0x78] sm:$0xff]
      %v433 = vrot.slane %v394, 4
      %v434 = vsel %vm346, %v433, 0
      %436 = vmatpush.msra.mxu0 0.0
      %437 = vmatpush.msra.mxu0 0.0
      %438 = vmatpush.msra.mxu0 0.0
      %439 = vmatpush.msra.mxu0 0.0
      %440 = vmatpush.msra.mxu0 0.0
      %441 = vmatpush.msra.mxu0 0.0
      %442 = vmatpush.msra.mxu0 0.0
      %443 = vmatpush.msra.mxu0 0.0
      %444 = vmatpush.msra.mxu0 %v430
      %445 = vmatpush.msra.mxu0 %v428
      %446 = vmatpush.msra.mxu0 %v426
      %447 = vmatpush.msra.mxu0 %v424
      %448 = vmatpush.msra.mxu0 %v422
      %449 = vmatpush.msra.mxu0 %v420
      %450 = vmatpush.msra.mxu0 %v418
      %451 = vmatpush.msra.mxu0 %v416
      %452 = vmatmul.f32.gmra.mxu0 %v434
      %v453 = vpop.f32.mrf.mxu0
      %v454 = vadd.f32 0.0, %v453
      %455 = vdwg.mxu0
      %456 = vmatpush.msra.mxu0 0.0
      %457 = vmatpush.msra.mxu0 0.0
      %458 = vmatpush.msra.mxu0 0.0
      %459 = vmatpush.msra.mxu0 0.0
      %460 = vmatpush.msra.mxu0 0.0
      %461 = vmatpush.msra.mxu0 0.0
      %462 = vmatpush.msra.mxu0 0.0
      %463 = vmatpush.msra.mxu0 0.0
      %464 = vmatpush.msra.mxu0 %v431
      %465 = vmatpush.msra.mxu0 %v429
      %466 = vmatpush.msra.mxu0 %v427
      %467 = vmatpush.msra.mxu0 %v425
      %468 = vmatpush.msra.mxu0 %v423
      %469 = vmatpush.msra.mxu0 %v421
      %470 = vmatpush.msra.mxu0 %v419
      %471 = vmatpush.msra.mxu0 %v417
      %472 = vmatmul.f32.gmra.mxu0 %v434
      %v473 = vpop.f32.mrf.mxu0
      %v474 = vadd.f32 0.0, %v473
      %475 = vdwg.mxu0
      %v476 = vsel %vm346, %v394, 0
      %478 = vmatpush.msra.mxu0 0.0
      %479 = vmatpush.msra.mxu0 0.0
      %480 = vmatpush.msra.mxu0 0.0
      %481 = vmatpush.msra.mxu0 0.0
      %482 = vmatpush.msra.mxu0 0.0
      %483 = vmatpush.msra.mxu0 0.0
      %484 = vmatpush.msra.mxu0 0.0
      %485 = vmatpush.msra.mxu0 0.0
      %486 = vmatpush.msra.mxu0 %v413
      %487 = vmatpush.msra.mxu0 %v411
      %488 = vmatpush.msra.mxu0 %v409
      %489 = vmatpush.msra.mxu0 %v407
      %490 = vmatpush.msra.mxu0 %v405
      %491 = vmatpush.msra.mxu0 %v403
      %492 = vmatpush.msra.mxu0 %v401
      %493 = vmatpush.msra.mxu0 %v399
      %494 = vmatmul.f32.gmra.mxu0 %v476
      %v495 = vpop.f32.mrf.mxu0
      %v496 = vadd.f32 %v454, %v495
      %497 = vdwg.mxu0
      %498 = vmatpush.msra.mxu0 0.0
      %499 = vmatpush.msra.mxu0 0.0
      %500 = vmatpush.msra.mxu0 0.0
      %501 = vmatpush.msra.mxu0 0.0
      %502 = vmatpush.msra.mxu0 0.0
      %503 = vmatpush.msra.mxu0 0.0
      %504 = vmatpush.msra.mxu0 0.0
      %505 = vmatpush.msra.mxu0 0.0
      %506 = vmatpush.msra.mxu0 %v414
      %507 = vmatpush.msra.mxu0 %v412
      %508 = vmatpush.msra.mxu0 %v410
      %509 = vmatpush.msra.mxu0 %v408
      %510 = vmatpush.msra.mxu0 %v406
      %511 = vmatpush.msra.mxu0 %v404
      %512 = vmatpush.msra.mxu0 %v402
      %513 = vmatpush.msra.mxu0 %v400
      %514 = vmatmul.f32.gmra.mxu0 %v476
      %v515 = vpop.f32.mrf.mxu0
      %v516 = vadd.f32 %v474, %v515
      %517 = vdwg.mxu0
      %s518 = scalar_lea.vmem %s6, 256
      %v519 = vld [vmem:[%s518] sm:$0xff]
      %v520 = vld [vmem:[%s518 + $0x8] sm:$0xff]
      %v521 = vld [vmem:[%s518 + $0x10] sm:$0xff]
      %v522 = vld [vmem:[%s518 + $0x18] sm:$0xff]
      %v523 = vld [vmem:[%s518 + $0x20] sm:$0xff]
      %v524 = vld [vmem:[%s518 + $0x28] sm:$0xff]
      %v525 = vld [vmem:[%s518 + $0x30] sm:$0xff]
      %v526 = vld [vmem:[%s518 + $0x38] sm:$0xff]
      %v527 = vld [vmem:[%s518 + $0x40] sm:$0xff]
      %v528 = vld [vmem:[%s518 + $0x48] sm:$0xff]
      %v529 = vld [vmem:[%s518 + $0x50] sm:$0xff]
      %v530 = vld [vmem:[%s518 + $0x58] sm:$0xff]
      %v531 = vld [vmem:[%s518 + $0x60] sm:$0xff]
      %v532 = vld [vmem:[%s518 + $0x68] sm:$0xff]
      %v533 = vld [vmem:[%s518 + $0x70] sm:$0xff]
      %v534 = vld [vmem:[%s518 + $0x78] sm:$0xff]
      %v536 = vsel %vm346, %v397, 0
      %538 = vmatpush.msra.mxu0 0.0
      %539 = vmatpush.msra.mxu0 0.0
      %540 = vmatpush.msra.mxu0 0.0
      %541 = vmatpush.msra.mxu0 0.0
      %542 = vmatpush.msra.mxu0 0.0
      %543 = vmatpush.msra.mxu0 0.0
      %544 = vmatpush.msra.mxu0 0.0
      %545 = vmatpush.msra.mxu0 0.0
      %546 = vmatpush.msra.mxu0 %v533
      %547 = vmatpush.msra.mxu0 %v531
      %548 = vmatpush.msra.mxu0 %v529
      %549 = vmatpush.msra.mxu0 %v527
      %550 = vmatpush.msra.mxu0 %v525
      %551 = vmatpush.msra.mxu0 %v523
      %552 = vmatpush.msra.mxu0 %v521
      %553 = vmatpush.msra.mxu0 %v519
      %554 = vmatmul.f32.gmra.mxu0 %v536
      %v555 = vpop.f32.mrf.mxu0
      %v556 = vadd.f32 0.0, %v555
      %557 = vdwg.mxu0
      %558 = vmatpush.msra.mxu0 0.0
      %559 = vmatpush.msra.mxu0 0.0
      %560 = vmatpush.msra.mxu0 0.0
      %561 = vmatpush.msra.mxu0 0.0
      %562 = vmatpush.msra.mxu0 0.0
      %563 = vmatpush.msra.mxu0 0.0
      %564 = vmatpush.msra.mxu0 0.0
      %565 = vmatpush.msra.mxu0 0.0
      %566 = vmatpush.msra.mxu0 %v534
      %567 = vmatpush.msra.mxu0 %v532
      %568 = vmatpush.msra.mxu0 %v530
      %569 = vmatpush.msra.mxu0 %v528
      %570 = vmatpush.msra.mxu0 %v526
      %571 = vmatpush.msra.mxu0 %v524
      %572 = vmatpush.msra.mxu0 %v522
      %573 = vmatpush.msra.mxu0 %v520
      %574 = vmatmul.f32.gmra.mxu0 %v536
      %v575 = vpop.f32.mrf.mxu0
      %v576 = vadd.f32 0.0, %v575
      %577 = vdwg.mxu0
      %v578 = vadd.f32 %v496, %v556
      %v579 = vadd.f32 %v516, %v576
      %s580 = scalar_lea.vmem %s6, 384
      %v581 = vld [vmem:[%s580] sm:$0xff]
      %v582 = vld [vmem:[%s580 + $0x8] sm:$0xff]
      %v583 = vld [vmem:[%s580 + $0x10] sm:$0xff]
      %v584 = vld [vmem:[%s580 + $0x18] sm:$0xff]
      %v585 = vld [vmem:[%s580 + $0x20] sm:$0xff]
      %v586 = vld [vmem:[%s580 + $0x28] sm:$0xff]
      %v587 = vld [vmem:[%s580 + $0x30] sm:$0xff]
      %v588 = vld [vmem:[%s580 + $0x38] sm:$0xff]
      %v589 = vld [vmem:[%s580 + $0x40] sm:$0xff]
      %v590 = vld [vmem:[%s580 + $0x48] sm:$0xff]
      %v591 = vld [vmem:[%s580 + $0x50] sm:$0xff]
      %v592 = vld [vmem:[%s580 + $0x58] sm:$0xff]
      %v593 = vld [vmem:[%s580 + $0x60] sm:$0xff]
      %v594 = vld [vmem:[%s580 + $0x68] sm:$0xff]
      %v595 = vld [vmem:[%s580 + $0x70] sm:$0xff]
      %v596 = vld [vmem:[%s580 + $0x78] sm:$0xff]
      %v597 = vrot.slane %v397, 4
      %v598 = vsel %vm346, %v597, 0
      %600 = vmatpush.msra.mxu0 0.0
      %601 = vmatpush.msra.mxu0 0.0
      %602 = vmatpush.msra.mxu0 0.0
      %603 = vmatpush.msra.mxu0 0.0
      %604 = vmatpush.msra.mxu0 0.0
      %605 = vmatpush.msra.mxu0 0.0
      %606 = vmatpush.msra.mxu0 0.0
      %607 = vmatpush.msra.mxu0 0.0
      %608 = vmatpush.msra.mxu0 %v595
      %609 = vmatpush.msra.mxu0 %v593
      %610 = vmatpush.msra.mxu0 %v591
      %611 = vmatpush.msra.mxu0 %v589
      %612 = vmatpush.msra.mxu0 %v587
      %613 = vmatpush.msra.mxu0 %v585
      %614 = vmatpush.msra.mxu0 %v583
      %615 = vmatpush.msra.mxu0 %v581
      %616 = vmatmul.f32.gmra.mxu0 %v598
      %v617 = vpop.f32.mrf.mxu0
      %v618 = vadd.f32 0.0, %v617
      %619 = vdwg.mxu0
      %620 = vmatpush.msra.mxu0 0.0
      %621 = vmatpush.msra.mxu0 0.0
      %622 = vmatpush.msra.mxu0 0.0
      %623 = vmatpush.msra.mxu0 0.0
      %624 = vmatpush.msra.mxu0 0.0
      %625 = vmatpush.msra.mxu0 0.0
      %626 = vmatpush.msra.mxu0 0.0
      %627 = vmatpush.msra.mxu0 0.0
      %628 = vmatpush.msra.mxu0 %v596
      %629 = vmatpush.msra.mxu0 %v594
      %630 = vmatpush.msra.mxu0 %v592
      %631 = vmatpush.msra.mxu0 %v590
      %632 = vmatpush.msra.mxu0 %v588
      %633 = vmatpush.msra.mxu0 %v586
      %634 = vmatpush.msra.mxu0 %v584
      %635 = vmatpush.msra.mxu0 %v582
      %636 = vmatmul.f32.gmra.mxu0 %v598
      %v637 = vpop.f32.mrf.mxu0
      %v638 = vadd.f32 0.0, %v637
      %639 = vdwg.mxu0
      %v640 = vadd.f32 %v578, %v618
      %v641 = vadd.f32 %v579, %v638
      %v642 = vld [vmem:[%s5] sm:$0xf]
      %644 = vset.pattern.permute.xlu0 0
      %645 = vperm.xlu0 %644, %v642
      %v646 = vpop.permute.xlu0 %645
      %v648 = vadd.f32 %v640, %v646
      %v649 = vadd.f32 %v641, %v646
      %vm650 = vcmp.ge.f32.partialorder %v648, 0.0
      %vm651 = vcmp.ge.f32.partialorder %v649, 0.0
      %652 = vset.pattern.permute.xlu0 1
      %653 = vperm.xlu0 %652, %v642
      %v654 = vpop.permute.xlu0 %653
      %v656 = vmul.f32 %v654, %v648
      %v657 = vmul.f32 %v654, %v649
      %v658 = vsel %vm650, %v648, %v656
      %v659 = vsel %vm651, %v649, %v657
      %v660 = vld [vmem:[%s288] sm:$0xff]
      %662 = vst [vmem:[#allocation1] ss:$2 sm:$0xff] %v660
      %v663 = vld.sshfl [vmem:[#allocation1] sm:$0xff pattern:$0x75316420]
      %v664 = vld.sshfl [vmem:[#allocation1 + $0x8] sm:$0xff pattern:$0x75316420]
      %667 = vst [vmem:[%s298] sm:$0xf] %v663
      %668 = vst [vmem:[%s298 + $0x8] sm:$0xf] %v664
      %v671 = vrot.slane %v658, 4
      %v672 = vrot.slane %v659, 4
      %675 = vst [vmem:[%s298] sm:$0xf0] %v671
      %676 = vst [vmem:[%s298 + $0x8] sm:$0xf0] %v672
      %p677 = scmp.lt.s32.totalorder %s18, 1
      %s678 = scalar_select %p677, %s18, 1
      %s679 = smul.addr %s678, 2
      %s680 = smul.addr %s679, 8
      %s681 = scalar_lea.vmem %s7, %s680
      // Predicated region
      $region49: #{unet_block_forward.1} parent=47 // pred_check
        %p682 = pneg %p193
      $region50: #{unet_block_forward.1} parent=47 // pred_check_branch
        %684 = sbr.rel (%p682) target = $region52
      $region51: #{unet_block_forward.1} parent=47 // pred_region
        _
      $region52: #{unet_block_forward.1} parent=47 // pred_fallthru
        _
    $region48: #{unet_block_forward.1} parent=5 // pred_fallthru
      _
    %p685 = scmp.le.s32.totalorder 2, %s13
    // Predicated region
    $region53: #{unet_block_forward.1} parent=5 // pred_check
      %p686 = pneg %p685
    $region54: #{unet_block_forward.1} parent=5 // pred_check_branch
      %688 = sbr.rel (%p686) target = $region56
    $region55: #{unet_block_forward.1} parent=5 // pred_region
      %s689 = ssub.s32 %s13, 2
      // Predicated region
      $region57: #{unet_block_forward.1} parent=55 // pred_check
        %p690 = pneg %p199
      $region58: #{unet_block_forward.1} parent=55 // pred_check_branch
        %692 = sbr.rel (%p690) target = $region60
      $region59: #{unet_block_forward.1} parent=55 // pred_region
        %p693 = scmp.lt.s32.totalorder %s19, 1
        %s694 = scalar_select %p693, %s19, 1
        %s695 = smul.addr %s694, 2
        %s696 = smul.addr %s695, 8
        %s697 = scalar_lea.vmem %s7, %s696
      $region60: #{unet_block_forward.1} parent=55 // pred_fallthru
        _
    $region56: #{unet_block_forward.1} parent=5 // pred_fallthru
      _
  $region6: #{unet_block_forward.1} parent=0 // loop_footer
    %s17 = sadd.s32 1, %s13
  $region7: #{unet_block_forward.1} parent=0 // loop_footer_branch
    %12 = sbr.rel target = $region3
  $region8: #{unet_block_forward.1} parent=0 // loop_exit
    _

</llo_original>
